<compile_context>
chip_gen: v7x
topology: tpu7x:2x2x1
jax: 0.10.0
libtpu: 0.0.40
codegen_flags: <defaults>
</compile_context>

<pallas_src>
import jax
import jax.numpy as jnp
from jax.experimental import pallas as pl
from jax.experimental.pallas import tpu as pltpu


# ---------------------------------------------------------------------------
# Pallas kernel: out[b, f, m] = sum_t x[b, t, m] * K[t, f, m]   (complex)
# ---------------------------------------------------------------------------
def _koopman_kernel(x_ref, w_ref, o_ref):
    # x_ref: (2, bb, T, mt)   [0]=real plane, [1]=imag plane
    # w_ref: (2, T, F, mt)
    # o_ref: (2, bb, F, mt)
    bb = x_ref.shape[1]
    T = x_ref.shape[2]
    F = w_ref.shape[2]
    mt = x_ref.shape[3]

    acc_r = jnp.zeros((bb, F, mt), dtype=jnp.float32)
    acc_i = jnp.zeros((bb, F, mt), dtype=jnp.float32)

    # T (= op_size) is a small static value; unrolled loop keeps only per-t
    # slices + the two accumulators live (no (bb, T, F, mt) intermediate).
    for t in range(T):
        xr_t = x_ref[0, :, t, :][:, None, :]   # (bb, 1, mt)
        xi_t = x_ref[1, :, t, :][:, None, :]
        wr_t = w_ref[0, t, :, :][None, :, :]   # (1, F, mt)
        wi_t = w_ref[1, t, :, :][None, :, :]
        acc_r = acc_r + xr_t * wr_t - xi_t * wi_t
        acc_i = acc_i + xr_t * wi_t + xi_t * wr_t

    o_ref[0, ...] = acc_r
    o_ref[1, ...] = acc_i


def _round_up(n, m):
    return ((n + m - 1) // m) * m


def _largest_divisor_leq(n, cap):
    for d in range(min(n, cap), 0, -1):
        if n % d == 0:
            return d
    return 1


def _spectral_contract(x_packed, w_packed):
    """x_packed: (2, Bk, T, Mp) f32, w_packed: (2, T, F, Mp) f32 -> (2, Bk, F, Mp)."""
    _, Bk, T, Mp = x_packed.shape
    F = w_packed.shape[2]
    assert Mp % 128 == 0, "mode axis must be lane-padded to a multiple of 128"

    # Lane tile (multiple of 128, capped) and batch tile.
    mt = 128 * _largest_divisor_leq(Mp // 128, 4)   # <= 512 lanes per step
    bb = _largest_divisor_leq(Bk, 8)

    grid = (Mp // mt, Bk // bb)                      # batch axis innermost

    return pl.pallas_call(
        _koopman_kernel,
        out_shape=jax.ShapeDtypeStruct((2, Bk, F, Mp), jnp.float32),
        grid=grid,
        in_specs=[
            # activations: depend on both grid axes
            pl.BlockSpec((2, bb, T, mt), lambda m, b: (0, b, 0, m)),
            # weights: depend only on the mode-tile axis -> revisited (VMEM
            # resident) across the inner batch loop, no re-DMA per batch tile.
            pl.BlockSpec((2, T, F, mt), lambda m, b: (0, 0, 0, m)),
        ],
        out_specs=pl.BlockSpec((2, bb, F, mt), lambda m, b: (0, b, 0, m)),
        compiler_params=pltpu.CompilerParams(
            # No cross-step reduction: both axes are parallel (megacore can
            # shard them across TensorCores on v7x).
            dimension_semantics=("parallel", "parallel"),
        ),
    )(x_packed, w_packed)


# ---------------------------------------------------------------------------
# Forward pass of Koopman_Operator2D
# ---------------------------------------------------------------------------
def koopman_operator_2d(x, k_re, k_im, modes_x, modes_y):
    """x: (B, op_size, H, W) f32; k_re/k_im: (op_size, op_size, mx, my) f32."""
    B, T, H, W = x.shape
    F = k_re.shape[1]
    M = modes_x * modes_y
    Mp = _round_up(M, 128)
    Wf = W // 2 + 1

    assert 2 * modes_x <= H, "low/high mode corners overlap (2*modes_x > H)"
    assert modes_y <= Wf, "modes_y exceeds rfft width"

    # ---- FFT glue (plain JAX) ----
    x_ft = jnp.fft.rfft2(x)                                   # (B, T, H, Wf) c64

    low = x_ft[:, :, :modes_x, :modes_y]                      # (B, T, mx, my)
    high = x_ft[:, :, H - modes_x:, :modes_y]                 # (B, T, mx, my)
    stacked = jnp.concatenate([low, high], axis=0)            # (2B, T, mx, my)
    stacked = stacked.reshape(2 * B, T, M)

    xr = jnp.real(stacked).astype(jnp.float32)
    xi = jnp.imag(stacked).astype(jnp.float32)
    x_packed = jnp.stack([xr, xi], axis=0)                    # (2, 2B, T, M)
    x_packed = jnp.pad(x_packed, ((0, 0), (0, 0), (0, 0), (0, Mp - M)))

    wr = k_re.reshape(T, F, M).astype(jnp.float32)
    wi = k_im.reshape(T, F, M).astype(jnp.float32)
    w_packed = jnp.stack([wr, wi], axis=0)                    # (2, T, F, M)
    w_packed = jnp.pad(w_packed, ((0, 0), (0, 0), (0, 0), (0, Mp - M)))

    # ---- Pallas spectral contraction ----
    out = _spectral_contract(x_packed, w_packed)              # (2, 2B, F, Mp)
    out = out[:, :, :, :M]
    out_c = (out[0] + 1j * out[1]).astype(jnp.complex64)      # (2B, F, M)
    out_c = out_c.reshape(2 * B, F, modes_x, modes_y)
    out_low, out_high = out_c[:B], out_c[B:]

    # ---- Build out_ft with concat + pad (no zeros-buffer + scatter) ----
    mid = jnp.zeros((B, F, H - 2 * modes_x, modes_y), dtype=jnp.complex64)
    cols = jnp.concatenate([out_low, mid, out_high], axis=2)  # (B, F, H, my)
    out_ft = jnp.pad(cols, ((0, 0), (0, 0), (0, 0), (0, Wf - modes_y)))

    return jnp.fft.irfft2(out_ft, s=(H, W)).astype(x.dtype)


# ---------------------------------------------------------------------------
# Pure-JAX reference (mirrors the PyTorch forward)
# ---------------------------------------------------------------------------
def _reference(x, k_re, k_im, modes_x, modes_y):
    B, T, H, W = x.shape
    kc = (k_re + 1j * k_im).astype(jnp.complex64)
    x_ft = jnp.fft.rfft2(x)
    out_ft = jnp.zeros(x_ft.shape, dtype=jnp.complex64)
    lo = jnp.einsum('btxy,tfxy->bfxy', x_ft[:, :, :modes_x, :modes_y], kc)
    hi = jnp.einsum('btxy,tfxy->bfxy', x_ft[:, :, H - modes_x:, :modes_y], kc)
    out_ft = out_ft.at[:, :, :modes_x, :modes_y].set(lo)
    out_ft = out_ft.at[:, :, H - modes_x:, :modes_y].set(hi)
    return jnp.fft.irfft2(out_ft, s=(H, W)).astype(x.dtype)


if __name__ == "__main__":
    # Small shapes consistent with the module: batch=2, op_size=4, H=W=16,
    # modes_x=modes_y=4.
    B, op_size, H, W = 2, 4, 16, 16
    modes_x, modes_y = 4, 4
    scale = 1.0 / (op_size * op_size)

    key = jax.random.PRNGKey(0)
    kx, kr, ki = jax.random.split(key, 3)

    x = jax.random.normal(kx, (B, op_size, H, W), dtype=jnp.float32)
    # scale * rand(op, op, mx, my, cfloat): uniform [0,1) real & imag parts.
    k_re = scale * jax.random.uniform(
        kr, (op_size, op_size, modes_x, modes_y), dtype=jnp.float32)
    k_im = scale * jax.random.uniform(
        ki, (op_size, op_size, modes_x, modes_y), dtype=jnp.float32)

    fwd = jax.jit(koopman_operator_2d, static_argnums=(3, 4))
    out = jax.block_until_ready(fwd(x, k_re, k_im, modes_x, modes_y))
    ref = jax.block_until_ready(_reference(x, k_re, k_im, modes_x, modes_y))

    assert out.shape == (B, op_size, H, W)
    assert jnp.allclose(out, ref, atol=1e-4, rtol=1e-4), "mismatch vs reference"

    print("KERNEL_OK")
</pallas_src>

<mosaic_0001>
module attributes {stable_mosaic.version = 11 : i64} {
  func.func @_koopman_kernel(%arg0: i32, %arg1: i32, %arg2: memref<2x4x4x128xf32, #tpu.memory_space<vmem>>, %arg3: memref<2x4x4x128xf32, #tpu.memory_space<vmem>>, %arg4: memref<2x4x4x128xf32, #tpu.memory_space<vmem>>) attributes {dimension_semantics = [#tpu.dimension_semantics<parallel>, #tpu.dimension_semantics<parallel>], iteration_bounds = array<i64: 1, 1>, scalar_prefetch = 0 : i64, scratch_operands = 0 : i64, tpu.core_type = #tpu.core_type<tc>, window_params = [{transform_indices = @transform_0, window_bounds = array<i64: 2, 4, 4, 128>}, {transform_indices = @transform_1, window_bounds = array<i64: 2, 4, 4, 128>}, {transform_indices = @transform_2, window_bounds = array<i64: 2, 4, 4, 128>}]} {
    %cst = arith.constant 0.000000e+00 : f32
    %0 = vector.broadcast %cst : f32 to vector<4x4x128xf32>
    %cst_0 = arith.constant 0.000000e+00 : f32
    %1 = vector.broadcast %cst_0 : f32 to vector<4x4x128xf32>
    %c0 = arith.constant 0 : index
    %c0_1 = arith.constant 0 : index
    %c0_2 = arith.constant 0 : index
    %c0_3 = arith.constant 0 : index
    %2 = vector.load %arg2[%c0, %c0_1, %c0_2, %c0_3] : memref<2x4x4x128xf32, #tpu.memory_space<vmem>>, vector<1x4x1x128xf32>
    %3 = vector.shape_cast %2 : vector<1x4x1x128xf32> to vector<4x128xf32>
    %4 = vector.shape_cast %3 : vector<4x128xf32> to vector<4x1x128xf32>
    %c1 = arith.constant 1 : index
    %c0_4 = arith.constant 0 : index
    %c0_5 = arith.constant 0 : index
    %c0_6 = arith.constant 0 : index
    %5 = vector.load %arg2[%c1, %c0_4, %c0_5, %c0_6] : memref<2x4x4x128xf32, #tpu.memory_space<vmem>>, vector<1x4x1x128xf32>
    %6 = vector.shape_cast %5 : vector<1x4x1x128xf32> to vector<4x128xf32>
    %7 = vector.shape_cast %6 : vector<4x128xf32> to vector<4x1x128xf32>
    %c0_7 = arith.constant 0 : index
    %c0_8 = arith.constant 0 : index
    %c0_9 = arith.constant 0 : index
    %c0_10 = arith.constant 0 : index
    %8 = vector.load %arg3[%c0_7, %c0_8, %c0_9, %c0_10] : memref<2x4x4x128xf32, #tpu.memory_space<vmem>>, vector<1x1x4x128xf32>
    %9 = vector.shape_cast %8 : vector<1x1x4x128xf32> to vector<4x128xf32>
    %10 = vector.shape_cast %9 : vector<4x128xf32> to vector<1x4x128xf32>
    %c1_11 = arith.constant 1 : index
    %c0_12 = arith.constant 0 : index
    %c0_13 = arith.constant 0 : index
    %c0_14 = arith.constant 0 : index
    %11 = vector.load %arg3[%c1_11, %c0_12, %c0_13, %c0_14] : memref<2x4x4x128xf32, #tpu.memory_space<vmem>>, vector<1x1x4x128xf32>
    %12 = vector.shape_cast %11 : vector<1x1x4x128xf32> to vector<4x128xf32>
    %13 = vector.shape_cast %12 : vector<4x128xf32> to vector<1x4x128xf32>
    %14 = vector.broadcast %4 : vector<4x1x128xf32> to vector<4x4x128xf32>
    %15 = vector.broadcast %10 : vector<1x4x128xf32> to vector<4x4x128xf32>
    %16 = arith.mulf %14, %15 : vector<4x4x128xf32>
    %17 = arith.addf %0, %16 : vector<4x4x128xf32>
    %18 = vector.broadcast %7 : vector<4x1x128xf32> to vector<4x4x128xf32>
    %19 = vector.broadcast %13 : vector<1x4x128xf32> to vector<4x4x128xf32>
    %20 = arith.mulf %18, %19 : vector<4x4x128xf32>
    %21 = arith.subf %17, %20 : vector<4x4x128xf32>
    %22 = vector.broadcast %4 : vector<4x1x128xf32> to vector<4x4x128xf32>
    %23 = vector.broadcast %13 : vector<1x4x128xf32> to vector<4x4x128xf32>
    %24 = arith.mulf %22, %23 : vector<4x4x128xf32>
    %25 = arith.addf %1, %24 : vector<4x4x128xf32>
    %26 = vector.broadcast %7 : vector<4x1x128xf32> to vector<4x4x128xf32>
    %27 = vector.broadcast %10 : vector<1x4x128xf32> to vector<4x4x128xf32>
    %28 = arith.mulf %26, %27 : vector<4x4x128xf32>
    %29 = arith.addf %25, %28 : vector<4x4x128xf32>
    %c0_15 = arith.constant 0 : index
    %c0_16 = arith.constant 0 : index
    %c1_17 = arith.constant 1 : index
    %c0_18 = arith.constant 0 : index
    %30 = vector.load %arg2[%c0_15, %c0_16, %c1_17, %c0_18] : memref<2x4x4x128xf32, #tpu.memory_space<vmem>>, vector<1x4x1x128xf32>
    %31 = vector.shape_cast %30 : vector<1x4x1x128xf32> to vector<4x128xf32>
    %32 = vector.shape_cast %31 : vector<4x128xf32> to vector<4x1x128xf32>
    %c1_19 = arith.constant 1 : index
    %c0_20 = arith.constant 0 : index
    %c1_21 = arith.constant 1 : index
    %c0_22 = arith.constant 0 : index
    %33 = vector.load %arg2[%c1_19, %c0_20, %c1_21, %c0_22] : memref<2x4x4x128xf32, #tpu.memory_space<vmem>>, vector<1x4x1x128xf32>
    %34 = vector.shape_cast %33 : vector<1x4x1x128xf32> to vector<4x128xf32>
    %35 = vector.shape_cast %34 : vector<4x128xf32> to vector<4x1x128xf32>
    %c0_23 = arith.constant 0 : index
    %c1_24 = arith.constant 1 : index
    %c0_25 = arith.constant 0 : index
    %c0_26 = arith.constant 0 : index
    %36 = vector.load %arg3[%c0_23, %c1_24, %c0_25, %c0_26] : memref<2x4x4x128xf32, #tpu.memory_space<vmem>>, vector<1x1x4x128xf32>
    %37 = vector.shape_cast %36 : vector<1x1x4x128xf32> to vector<4x128xf32>
    %38 = vector.shape_cast %37 : vector<4x128xf32> to vector<1x4x128xf32>
    %c1_27 = arith.constant 1 : index
    %c1_28 = arith.constant 1 : index
    %c0_29 = arith.constant 0 : index
    %c0_30 = arith.constant 0 : index
    %39 = vector.load %arg3[%c1_27, %c1_28, %c0_29, %c0_30] : memref<2x4x4x128xf32, #tpu.memory_space<vmem>>, vector<1x1x4x128xf32>
    %40 = vector.shape_cast %39 : vector<1x1x4x128xf32> to vector<4x128xf32>
    %41 = vector.shape_cast %40 : vector<4x128xf32> to vector<1x4x128xf32>
    %42 = vector.broadcast %32 : vector<4x1x128xf32> to vector<4x4x128xf32>
    %43 = vector.broadcast %38 : vector<1x4x128xf32> to vector<4x4x128xf32>
    %44 = arith.mulf %42, %43 : vector<4x4x128xf32>
    %45 = arith.addf %21, %44 : vector<4x4x128xf32>
    %46 = vector.broadcast %35 : vector<4x1x128xf32> to vector<4x4x128xf32>
    %47 = vector.broadcast %41 : vector<1x4x128xf32> to vector<4x4x128xf32>
    %48 = arith.mulf %46, %47 : vector<4x4x128xf32>
    %49 = arith.subf %45, %48 : vector<4x4x128xf32>
    %50 = vector.broadcast %32 : vector<4x1x128xf32> to vector<4x4x128xf32>
    %51 = vector.broadcast %41 : vector<1x4x128xf32> to vector<4x4x128xf32>
    %52 = arith.mulf %50, %51 : vector<4x4x128xf32>
    %53 = arith.addf %29, %52 : vector<4x4x128xf32>
    %54 = vector.broadcast %35 : vector<4x1x128xf32> to vector<4x4x128xf32>
    %55 = vector.broadcast %38 : vector<1x4x128xf32> to vector<4x4x128xf32>
    %56 = arith.mulf %54, %55 : vector<4x4x128xf32>
    %57 = arith.addf %53, %56 : vector<4x4x128xf32>
    %c0_31 = arith.constant 0 : index
    %c0_32 = arith.constant 0 : index
    %c2 = arith.constant 2 : index
    %c0_33 = arith.constant 0 : index
    %58 = vector.load %arg2[%c0_31, %c0_32, %c2, %c0_33] : memref<2x4x4x128xf32, #tpu.memory_space<vmem>>, vector<1x4x1x128xf32>
    %59 = vector.shape_cast %58 : vector<1x4x1x128xf32> to vector<4x128xf32>
    %60 = vector.shape_cast %59 : vector<4x128xf32> to vector<4x1x128xf32>
    %c1_34 = arith.constant 1 : index
    %c0_35 = arith.constant 0 : index
    %c2_36 = arith.constant 2 : index
    %c0_37 = arith.constant 0 : index
    %61 = vector.load %arg2[%c1_34, %c0_35, %c2_36, %c0_37] : memref<2x4x4x128xf32, #tpu.memory_space<vmem>>, vector<1x4x1x128xf32>
    %62 = vector.shape_cast %61 : vector<1x4x1x128xf32> to vector<4x128xf32>
    %63 = vector.shape_cast %62 : vector<4x128xf32> to vector<4x1x128xf32>
    %c0_38 = arith.constant 0 : index
    %c2_39 = arith.constant 2 : index
    %c0_40 = arith.constant 0 : index
    %c0_41 = arith.constant 0 : index
    %64 = vector.load %arg3[%c0_38, %c2_39, %c0_40, %c0_41] : memref<2x4x4x128xf32, #tpu.memory_space<vmem>>, vector<1x1x4x128xf32>
    %65 = vector.shape_cast %64 : vector<1x1x4x128xf32> to vector<4x128xf32>
    %66 = vector.shape_cast %65 : vector<4x128xf32> to vector<1x4x128xf32>
    %c1_42 = arith.constant 1 : index
    %c2_43 = arith.constant 2 : index
    %c0_44 = arith.constant 0 : index
    %c0_45 = arith.constant 0 : index
    %67 = vector.load %arg3[%c1_42, %c2_43, %c0_44, %c0_45] : memref<2x4x4x128xf32, #tpu.memory_space<vmem>>, vector<1x1x4x128xf32>
    %68 = vector.shape_cast %67 : vector<1x1x4x128xf32> to vector<4x128xf32>
    %69 = vector.shape_cast %68 : vector<4x128xf32> to vector<1x4x128xf32>
    %70 = vector.broadcast %60 : vector<4x1x128xf32> to vector<4x4x128xf32>
    %71 = vector.broadcast %66 : vector<1x4x128xf32> to vector<4x4x128xf32>
    %72 = arith.mulf %70, %71 : vector<4x4x128xf32>
    %73 = arith.addf %49, %72 : vector<4x4x128xf32>
    %74 = vector.broadcast %63 : vector<4x1x128xf32> to vector<4x4x128xf32>
    %75 = vector.broadcast %69 : vector<1x4x128xf32> to vector<4x4x128xf32>
    %76 = arith.mulf %74, %75 : vector<4x4x128xf32>
    %77 = arith.subf %73, %76 : vector<4x4x128xf32>
    %78 = vector.broadcast %60 : vector<4x1x128xf32> to vector<4x4x128xf32>
    %79 = vector.broadcast %69 : vector<1x4x128xf32> to vector<4x4x128xf32>
    %80 = arith.mulf %78, %79 : vector<4x4x128xf32>
    %81 = arith.addf %57, %80 : vector<4x4x128xf32>
    %82 = vector.broadcast %63 : vector<4x1x128xf32> to vector<4x4x128xf32>
    %83 = vector.broadcast %66 : vector<1x4x128xf32> to vector<4x4x128xf32>
    %84 = arith.mulf %82, %83 : vector<4x4x128xf32>
    %85 = arith.addf %81, %84 : vector<4x4x128xf32>
    %c0_46 = arith.constant 0 : index
    %c0_47 = arith.constant 0 : index
    %c3 = arith.constant 3 : index
    %c0_48 = arith.constant 0 : index
    %86 = vector.load %arg2[%c0_46, %c0_47, %c3, %c0_48] : memref<2x4x4x128xf32, #tpu.memory_space<vmem>>, vector<1x4x1x128xf32>
    %87 = vector.shape_cast %86 : vector<1x4x1x128xf32> to vector<4x128xf32>
    %88 = vector.shape_cast %87 : vector<4x128xf32> to vector<4x1x128xf32>
    %c1_49 = arith.constant 1 : index
    %c0_50 = arith.constant 0 : index
    %c3_51 = arith.constant 3 : index
    %c0_52 = arith.constant 0 : index
    %89 = vector.load %arg2[%c1_49, %c0_50, %c3_51, %c0_52] : memref<2x4x4x128xf32, #tpu.memory_space<vmem>>, vector<1x4x1x128xf32>
    %90 = vector.shape_cast %89 : vector<1x4x1x128xf32> to vector<4x128xf32>
    %91 = vector.shape_cast %90 : vector<4x128xf32> to vector<4x1x128xf32>
    %c0_53 = arith.constant 0 : index
    %c3_54 = arith.constant 3 : index
    %c0_55 = arith.constant 0 : index
    %c0_56 = arith.constant 0 : index
    %92 = vector.load %arg3[%c0_53, %c3_54, %c0_55, %c0_56] : memref<2x4x4x128xf32, #tpu.memory_space<vmem>>, vector<1x1x4x128xf32>
    %93 = vector.shape_cast %92 : vector<1x1x4x128xf32> to vector<4x128xf32>
    %94 = vector.shape_cast %93 : vector<4x128xf32> to vector<1x4x128xf32>
    %c1_57 = arith.constant 1 : index
    %c3_58 = arith.constant 3 : index
    %c0_59 = arith.constant 0 : index
    %c0_60 = arith.constant 0 : index
    %95 = vector.load %arg3[%c1_57, %c3_58, %c0_59, %c0_60] : memref<2x4x4x128xf32, #tpu.memory_space<vmem>>, vector<1x1x4x128xf32>
    %96 = vector.shape_cast %95 : vector<1x1x4x128xf32> to vector<4x128xf32>
    %97 = vector.shape_cast %96 : vector<4x128xf32> to vector<1x4x128xf32>
    %98 = vector.broadcast %88 : vector<4x1x128xf32> to vector<4x4x128xf32>
    %99 = vector.broadcast %94 : vector<1x4x128xf32> to vector<4x4x128xf32>
    %100 = arith.mulf %98, %99 : vector<4x4x128xf32>
    %101 = arith.addf %77, %100 : vector<4x4x128xf32>
    %102 = vector.broadcast %91 : vector<4x1x128xf32> to vector<4x4x128xf32>
    %103 = vector.broadcast %97 : vector<1x4x128xf32> to vector<4x4x128xf32>
    %104 = arith.mulf %102, %103 : vector<4x4x128xf32>
    %105 = arith.subf %101, %104 : vector<4x4x128xf32>
    %106 = vector.broadcast %88 : vector<4x1x128xf32> to vector<4x4x128xf32>
    %107 = vector.broadcast %97 : vector<1x4x128xf32> to vector<4x4x128xf32>
    %108 = arith.mulf %106, %107 : vector<4x4x128xf32>
    %109 = arith.addf %85, %108 : vector<4x4x128xf32>
    %110 = vector.broadcast %91 : vector<4x1x128xf32> to vector<4x4x128xf32>
    %111 = vector.broadcast %94 : vector<1x4x128xf32> to vector<4x4x128xf32>
    %112 = arith.mulf %110, %111 : vector<4x4x128xf32>
    %113 = arith.addf %109, %112 : vector<4x4x128xf32>
    %c0_61 = arith.constant 0 : index
    %c0_62 = arith.constant 0 : index
    %c0_63 = arith.constant 0 : index
    %c0_64 = arith.constant 0 : index
    %114 = vector.load %arg4[%c0_61, %c0_62, %c0_63, %c0_64] : memref<2x4x4x128xf32, #tpu.memory_space<vmem>>, vector<1x4x4x128xf32>
    %115 = vector.shape_cast %114 : vector<1x4x4x128xf32> to vector<4x4x128xf32>
    %116 = vector.shape_cast %105 : vector<4x4x128xf32> to vector<1x4x4x128xf32>
    tpu.vector_store %arg4[%c0_61, %c0_62, %c0_63, %c0_64], %116 {strides = array<i32>} : memref<2x4x4x128xf32, #tpu.memory_space<vmem>>, vector<1x4x4x128xf32>,
    %c1_65 = arith.constant 1 : index
    %c0_66 = arith.constant 0 : index
    %c0_67 = arith.constant 0 : index
    %c0_68 = arith.constant 0 : index
    %117 = vector.load %arg4[%c1_65, %c0_66, %c0_67, %c0_68] : memref<2x4x4x128xf32, #tpu.memory_space<vmem>>, vector<1x4x4x128xf32>
    %118 = vector.shape_cast %117 : vector<1x4x4x128xf32> to vector<4x4x128xf32>
    %119 = vector.shape_cast %113 : vector<4x4x128xf32> to vector<1x4x4x128xf32>
    tpu.vector_store %arg4[%c1_65, %c0_66, %c0_67, %c0_68], %119 {strides = array<i32>} : memref<2x4x4x128xf32, #tpu.memory_space<vmem>>, vector<1x4x4x128xf32>,
    return
  }
  func.func @transform_0(%arg0: i32, %arg1: i32) -> (i32, i32, i32, i32) {
    %c0_i32 = arith.constant 0 : i32
    %c0_i32_0 = arith.constant 0 : i32
    %c0_i32_1 = arith.constant 0 : i32
    return %c0_i32, %arg1, %c0_i32_0, %arg0 : i32, i32, i32, i32
  }
  func.func @transform_1(%arg0: i32, %arg1: i32) -> (i32, i32, i32, i32) {
    %c0_i32 = arith.constant 0 : i32
    %c0_i32_0 = arith.constant 0 : i32
    %c0_i32_1 = arith.constant 0 : i32
    %c0_i32_2 = arith.constant 0 : i32
    return %c0_i32, %c0_i32_0, %c0_i32_1, %arg0 : i32, i32, i32, i32
  }
  func.func @transform_2(%arg0: i32, %arg1: i32) -> (i32, i32, i32, i32) {
    %c0_i32 = arith.constant 0 : i32
    %c0_i32_0 = arith.constant 0 : i32
    %c0_i32_1 = arith.constant 0 : i32
    return %c0_i32, %arg1, %c0_i32_0, %arg0 : i32, i32, i32, i32
  }
}

</mosaic_0001>

<llo_original>
// kernel: reverse.0
$region0: #{reverse.0}
  %s0 = inlined_call_operand.vmem [shape: f32[2,4,16,7], index: 0, kind: input, shape index: {}]
  %s1 = inlined_call_operand.vmem [shape: f32[2,4,16,7], index: 1, kind: output, shape index: {}]
  $region1: #{reverse.0} parent=0
    #allocation0 [shape = 'u8[65536]{0}', space=vmem, size = 0x10000, scoped, tag = 'operand span for operand 0']
    #allocation1 [shape = 'u8[32768]{0}', space=vmem, size = 0x8000, scoped, tag = 'operand span for operand 1']
    %s2 = scalar_lea.vmem [#allocation0], 8
    // Predicated region
    $region2: #{reverse.0} parent=1 // pred_check
      _
    $region3: #{reverse.0} parent=1 // pred_check_branch
      %4 = sbr.rel (0) target = $region5
    $region4: #{reverse.0} parent=1 // pred_region
      // Predicated region
      $region6: #{reverse.0} parent=4 // pred_check
        _
      $region7: #{reverse.0} parent=4 // pred_check_branch
        %6 = sbr.rel (0) target = $region9
      $region8: #{reverse.0} parent=4 // pred_region
        // Predicated region
        $region21: #{reverse.0} parent=8 // pred_check
          _
        $region22: #{reverse.0} parent=8 // pred_check_branch
          %35 = sbr.rel (0) target = $region24
        $region23: #{reverse.0} parent=8 // pred_region
          loop: start=0, step=1, limit=1
          $region25: #{reverse.0} parent=23 // loop_pre_header
            _
          $region26: #{reverse.0} parent=23 // loop_header
            %s37 = sphi 0, %s41
            %p38 = scmp.ge.s32.totalorder %s37, 1
            %s42 = sphi %s0, %s0
            %s43 = sphi %s2, %s2
          $region27: #{reverse.0} parent=23 // loop_header_branch
            %40 = sbr.rel (%p38) target = $region31
          $region28: #{reverse.0} parent=23 // loop_body
            %v44 = vld [vmem:[%s42] sm:$0xff]
            %45 = vst [vmem:[%s43] sm:$0xff] %v44
            %v46 = vld [vmem:[%s42 + $0x8] sm:$0xff]
            %47 = vst [vmem:[%s43 + $0x10] sm:$0xff] %v46
            %v48 = vld [vmem:[%s42 + $0x10] sm:$0xff]
            %49 = vst [vmem:[%s43 + $0x20] sm:$0xff] %v48
            %v50 = vld [vmem:[%s42 + $0x18] sm:$0xff]
            %51 = vst [vmem:[%s43 + $0x30] sm:$0xff] %v50
            %v52 = vld [vmem:[%s42 + $0x20] sm:$0xff]
            %53 = vst [vmem:[%s43 + $0x40] sm:$0xff] %v52
            %v54 = vld [vmem:[%s42 + $0x28] sm:$0xff]
            %55 = vst [vmem:[%s43 + $0x50] sm:$0xff] %v54
            %v56 = vld [vmem:[%s42 + $0x30] sm:$0xff]
            %57 = vst [vmem:[%s43 + $0x60] sm:$0xff] %v56
            %v58 = vld [vmem:[%s42 + $0x38] sm:$0xff]
            %59 = vst [vmem:[%s43 + $0x70] sm:$0xff] %v58
          $region29: #{reverse.0} parent=23 // loop_footer
            %s41 = sadd.s32 1, %s37
          $region30: #{reverse.0} parent=23 // loop_footer_branch
            %36 = sbr.rel target = $region26
          $region31: #{reverse.0} parent=23 // loop_exit
            _
        $region24: #{reverse.0} parent=8 // pred_fallthru
          _
        // Predicated region
        $region32: #{reverse.0} parent=8 // pred_check
          _
        $region33: #{reverse.0} parent=8 // pred_check_branch
          %61 = sbr.rel target = $region35
        $region34: #{reverse.0} parent=8 // pred_region
          _
        $region35: #{reverse.0} parent=8 // pred_fallthru
          _
      $region9: #{reverse.0} parent=4 // pred_fallthru
        _
      // Predicated region
      $region10: #{reverse.0} parent=4 // pred_check
        _
      $region11: #{reverse.0} parent=4 // pred_check_branch
        %8 = sbr.rel target = $region13
      $region12: #{reverse.0} parent=4 // pred_region
        loop: start=0, step=1, limit=1
        $region14: #{reverse.0} parent=12 // loop_pre_header
          _
        $region15: #{reverse.0} parent=12 // loop_header
          %s11 = sphi 0, %s15
          %p12 = scmp.ge.s32.totalorder %s11, 1
          %s16 = sphi %s0, %s0
          %s17 = sphi %s2, %s2
        $region16: #{reverse.0} parent=12 // loop_header_branch
          %14 = sbr.rel (%p12) target = $region20
        $region17: #{reverse.0} parent=12 // loop_body
          %v18 = vld [vmem:[%s16] sm:$0xff]
          %19 = vst [vmem:[%s17] sm:$0xff] %v18
          %v20 = vld [vmem:[%s16 + $0x8] sm:$0xff]
          %21 = vst [vmem:[%s17 + $0x10] sm:$0xff] %v20
          %v22 = vld [vmem:[%s16 + $0x10] sm:$0xff]
          %23 = vst [vmem:[%s17 + $0x20] sm:$0xff] %v22
          %v24 = vld [vmem:[%s16 + $0x18] sm:$0xff]
          %25 = vst [vmem:[%s17 + $0x30] sm:$0xff] %v24
          %v26 = vld [vmem:[%s16 + $0x20] sm:$0xff]
          %27 = vst [vmem:[%s17 + $0x40] sm:$0xff] %v26
          %v28 = vld [vmem:[%s16 + $0x28] sm:$0xff]
          %29 = vst [vmem:[%s17 + $0x50] sm:$0xff] %v28
          %v30 = vld [vmem:[%s16 + $0x30] sm:$0xff]
          %31 = vst [vmem:[%s17 + $0x60] sm:$0xff] %v30
          %v32 = vld [vmem:[%s16 + $0x38] sm:$0xff]
          %33 = vst [vmem:[%s17 + $0x70] sm:$0xff] %v32
        $region18: #{reverse.0} parent=12 // loop_footer
          %s15 = sadd.s32 1, %s11
        $region19: #{reverse.0} parent=12 // loop_footer_branch
          %10 = sbr.rel target = $region15
        $region20: #{reverse.0} parent=12 // loop_exit
          _
      $region13: #{reverse.0} parent=4 // pred_fallthru
        _
    $region5: #{reverse.0} parent=1 // pred_fallthru
      _
    %62 = vnop
    %s63 = scalar_lea.vmem [#allocation0], 7
    %v64 = vld [vmem:[%s63] ss:$-1 sm:$0xff]
    %v65 = vrot.slane %v64, 1
    %66 = vst [vmem:[#allocation1] sm:$0xff] %v65
    %s67 = scalar_lea.vmem [#allocation0], 8
    %s68 = scalar_lea.vmem %s67, 7 [#allocation0]
    %v69 = vld [vmem:[%s68] ss:$-1 sm:$0xff]
    %v70 = vrot.slane %v69, 1
    %v71 = vlaneseq
    %v72 = vshrl.u32 %v71, 7
    %vm73 = vcmp.lt.s32.totalorder %v72, 7
    %74 = vst.msk [vmem:[#allocation1] sm:$0xff] %vm73, %v70
    %s75 = scalar_lea.vmem [#allocation1], 8
    %s76 = scalar_lea.vmem [#allocation0], 16
    %s77 = scalar_lea.vmem %s76, 7 [#allocation0]
    %v78 = vld [vmem:[%s77] ss:$-1 sm:$0xff]
    %v79 = vrot.slane %v78, 1
    %80 = vst [vmem:[%s75] sm:$0xff] %v79
    %s81 = scalar_lea.vmem %s76, 8 [#allocation0]
    %s82 = scalar_lea.vmem %s81, 7 [#allocation0]
    %v83 = vld [vmem:[%s82] ss:$-1 sm:$0xff]
    %v84 = vrot.slane %v83, 1
    %v85 = vlaneseq
    %v86 = vshrl.u32 %v85, 7
    %vm87 = vcmp.lt.s32.totalorder %v86, 7
    %88 = vst.msk [vmem:[%s75] sm:$0xff] %vm87, %v84
    %s89 = scalar_lea.vmem [#allocation1], 16
    %s90 = scalar_lea.vmem [#allocation0], 32
    %s91 = scalar_lea.vmem %s90, 7 [#allocation0]
    %v92 = vld [vmem:[%s91] ss:$-1 sm:$0xff]
    %v93 = vrot.slane %v92, 1
    %94 = vst [vmem:[%s89] sm:$0xff] %v93
    %s95 = scalar_lea.vmem %s90, 8 [#allocation0]
    %s96 = scalar_lea.vmem %s95, 7 [#allocation0]
    %v97 = vld [vmem:[%s96] ss:$-1 sm:$0xff]
    %v98 = vrot.slane %v97, 1
    %v99 = vlaneseq
    %v100 = vshrl.u32 %v99, 7
    %vm101 = vcmp.lt.s32.totalorder %v100, 7
    %102 = vst.msk [vmem:[%s89] sm:$0xff] %vm101, %v98
    %s103 = scalar_lea.vmem [#allocation1], 24
    %s104 = scalar_lea.vmem [#allocation0], 48
    %s105 = scalar_lea.vmem %s104, 7 [#allocation0]
    %v106 = vld [vmem:[%s105] ss:$-1 sm:$0xff]
    %v107 = vrot.slane %v106, 1
    %108 = vst [vmem:[%s103] sm:$0xff] %v107
    %s109 = scalar_lea.vmem %s104, 8 [#allocation0]
    %s110 = scalar_lea.vmem %s109, 7 [#allocation0]
    %v111 = vld [vmem:[%s110] ss:$-1 sm:$0xff]
    %v112 = vrot.slane %v111, 1
    %v113 = vlaneseq
    %v114 = vshrl.u32 %v113, 7
    %vm115 = vcmp.lt.s32.totalorder %v114, 7
    %116 = vst.msk [vmem:[%s103] sm:$0xff] %vm115, %v112
    %s117 = scalar_lea.vmem [#allocation1], 32
    %s118 = scalar_lea.vmem [#allocation0], 64
    %s119 = scalar_lea.vmem %s118, 7 [#allocation0]
    %v120 = vld [vmem:[%s119] ss:$-1 sm:$0xff]
    %v121 = vrot.slane %v120, 1
    %122 = vst [vmem:[%s117] sm:$0xff] %v121
    %s123 = scalar_lea.vmem %s118, 8 [#allocation0]
    %s124 = scalar_lea.vmem %s123, 7 [#allocation0]
    %v125 = vld [vmem:[%s124] ss:$-1 sm:$0xff]
    %v126 = vrot.slane %v125, 1
    %v127 = vlaneseq
    %v128 = vshrl.u32 %v127, 7
    %vm129 = vcmp.lt.s32.totalorder %v128, 7
    %130 = vst.msk [vmem:[%s117] sm:$0xff] %vm129, %v126
    %s131 = scalar_lea.vmem [#allocation1], 40
    %s132 = scalar_lea.vmem [#allocation0], 80
    %s133 = scalar_lea.vmem %s132, 7 [#allocation0]
    %v134 = vld [vmem:[%s133] ss:$-1 sm:$0xff]
    %v135 = vrot.slane %v134, 1
    %136 = vst [vmem:[%s131] sm:$0xff] %v135
    %s137 = scalar_lea.vmem %s132, 8 [#allocation0]
    %s138 = scalar_lea.vmem %s137, 7 [#allocation0]
    %v139 = vld [vmem:[%s138] ss:$-1 sm:$0xff]
    %v140 = vrot.slane %v139, 1
    %v141 = vlaneseq
    %v142 = vshrl.u32 %v141, 7
    %vm143 = vcmp.lt.s32.totalorder %v142, 7
    %144 = vst.msk [vmem:[%s131] sm:$0xff] %vm143, %v140
    %s145 = scalar_lea.vmem [#allocation1], 48
    %s146 = scalar_lea.vmem [#allocation0], 96
    %s147 = scalar_lea.vmem %s146, 7 [#allocation0]
    %v148 = vld [vmem:[%s147] ss:$-1 sm:$0xff]
    %v149 = vrot.slane %v148, 1
    %150 = vst [vmem:[%s145] sm:$0xff] %v149
    %s151 = scalar_lea.vmem %s146, 8 [#allocation0]
    %s152 = scalar_lea.vmem %s151, 7 [#allocation0]
    %v153 = vld [vmem:[%s152] ss:$-1 sm:$0xff]
    %v154 = vrot.slane %v153, 1
    %v155 = vlaneseq
    %v156 = vshrl.u32 %v155, 7
    %vm157 = vcmp.lt.s32.totalorder %v156, 7
    %158 = vst.msk [vmem:[%s145] sm:$0xff] %vm157, %v154
    %s159 = scalar_lea.vmem [#allocation1], 56
    %s160 = scalar_lea.vmem [#allocation0], 112
    %s161 = scalar_lea.vmem %s160, 7 [#allocation0]
    %v162 = vld [vmem:[%s161] ss:$-1 sm:$0xff]
    %v163 = vrot.slane %v162, 1
    %164 = vst [vmem:[%s159] sm:$0xff] %v163
    %s165 = scalar_lea.vmem %s160, 8 [#allocation0]
    %s166 = scalar_lea.vmem %s165, 7 [#allocation0]
    %v167 = vld [vmem:[%s166] ss:$-1 sm:$0xff]
    %v168 = vrot.slane %v167, 1
    %v169 = vlaneseq
    %v170 = vshrl.u32 %v169, 7
    %vm171 = vcmp.lt.s32.totalorder %v170, 7
    %172 = vst.msk [vmem:[%s159] sm:$0xff] %vm171, %v168
    // Predicated region
    $region36: #{reverse.0} parent=1 // pred_check
      _
    $region37: #{reverse.0} parent=1 // pred_check_branch
      %174 = sbr.rel (0) target = $region39
    $region38: #{reverse.0} parent=1 // pred_region
      // Predicated region
      $region40: #{reverse.0} parent=38 // pred_check
        _
      $region41: #{reverse.0} parent=38 // pred_check_branch
        %176 = sbr.rel (0) target = $region43
      $region42: #{reverse.0} parent=38 // pred_region
        // Predicated region
        $region55: #{reverse.0} parent=42 // pred_check
          _
        $region56: #{reverse.0} parent=42 // pred_check_branch
          %205 = sbr.rel (0) target = $region58
        $region57: #{reverse.0} parent=42 // pred_region
          loop: start=0, step=1, limit=1
          $region59: #{reverse.0} parent=57 // loop_pre_header
            _
          $region60: #{reverse.0} parent=57 // loop_header
            %s207 = sphi 0, %s211
            %p208 = scmp.ge.s32.totalorder %s207, 1
            %s212 = sphi [#allocation1], [#allocation1]
            %s213 = sphi %s1, %s1
          $region61: #{reverse.0} parent=57 // loop_header_branch
            %210 = sbr.rel (%p208) target = $region65
          $region62: #{reverse.0} parent=57 // loop_body
            %v214 = vld [vmem:[%s212] sm:$0xff]
            %215 = vst [vmem:[%s213] sm:$0xff] %v214
            %v216 = vld [vmem:[%s212 + $0x8] sm:$0xff]
            %217 = vst [vmem:[%s213 + $0x8] sm:$0xff] %v216
            %v218 = vld [vmem:[%s212 + $0x10] sm:$0xff]
            %219 = vst [vmem:[%s213 + $0x10] sm:$0xff] %v218
            %v220 = vld [vmem:[%s212 + $0x18] sm:$0xff]
            %221 = vst [vmem:[%s213 + $0x18] sm:$0xff] %v220
            %v222 = vld [vmem:[%s212 + $0x20] sm:$0xff]
            %223 = vst [vmem:[%s213 + $0x20] sm:$0xff] %v222
            %v224 = vld [vmem:[%s212 + $0x28] sm:$0xff]
            %225 = vst [vmem:[%s213 + $0x28] sm:$0xff] %v224
            %v226 = vld [vmem:[%s212 + $0x30] sm:$0xff]
            %227 = vst [vmem:[%s213 + $0x30] sm:$0xff] %v226
            %v228 = vld [vmem:[%s212 + $0x38] sm:$0xff]
            %229 = vst [vmem:[%s213 + $0x38] sm:$0xff] %v228
          $region63: #{reverse.0} parent=57 // loop_footer
            %s211 = sadd.s32 1, %s207
          $region64: #{reverse.0} parent=57 // loop_footer_branch
            %206 = sbr.rel target = $region60
          $region65: #{reverse.0} parent=57 // loop_exit
            _
        $region58: #{reverse.0} parent=42 // pred_fallthru
          _
        // Predicated region
        $region66: #{reverse.0} parent=42 // pred_check
          _
        $region67: #{reverse.0} parent=42 // pred_check_branch
          %231 = sbr.rel target = $region69
        $region68: #{reverse.0} parent=42 // pred_region
          _
        $region69: #{reverse.0} parent=42 // pred_fallthru
          _
      $region43: #{reverse.0} parent=38 // pred_fallthru
        _
      // Predicated region
      $region44: #{reverse.0} parent=38 // pred_check
        _
      $region45: #{reverse.0} parent=38 // pred_check_branch
        %178 = sbr.rel target = $region47
      $region46: #{reverse.0} parent=38 // pred_region
        loop: start=0, step=1, limit=1
        $region48: #{reverse.0} parent=46 // loop_pre_header
          _
        $region49: #{reverse.0} parent=46 // loop_header
          %s181 = sphi 0, %s185
          %p182 = scmp.ge.s32.totalorder %s181, 1
          %s186 = sphi [#allocation1], [#allocation1]
          %s187 = sphi %s1, %s1
        $region50: #{reverse.0} parent=46 // loop_header_branch
          %184 = sbr.rel (%p182) target = $region54
        $region51: #{reverse.0} parent=46 // loop_body
          %v188 = vld [vmem:[%s186] sm:$0xff]
          %189 = vst [vmem:[%s187] sm:$0xff] %v188
          %v190 = vld [vmem:[%s186 + $0x8] sm:$0xff]
          %191 = vst [vmem:[%s187 + $0x8] sm:$0xff] %v190
          %v192 = vld [vmem:[%s186 + $0x10] sm:$0xff]
          %193 = vst [vmem:[%s187 + $0x10] sm:$0xff] %v192
          %v194 = vld [vmem:[%s186 + $0x18] sm:$0xff]
          %195 = vst [vmem:[%s187 + $0x18] sm:$0xff] %v194
          %v196 = vld [vmem:[%s186 + $0x20] sm:$0xff]
          %197 = vst [vmem:[%s187 + $0x20] sm:$0xff] %v196
          %v198 = vld [vmem:[%s186 + $0x28] sm:$0xff]
          %199 = vst [vmem:[%s187 + $0x28] sm:$0xff] %v198
          %v200 = vld [vmem:[%s186 + $0x30] sm:$0xff]
          %201 = vst [vmem:[%s187 + $0x30] sm:$0xff] %v200
          %v202 = vld [vmem:[%s186 + $0x38] sm:$0xff]
          %203 = vst [vmem:[%s187 + $0x38] sm:$0xff] %v202
        $region52: #{reverse.0} parent=46 // loop_footer
          %s185 = sadd.s32 1, %s181
        $region53: #{reverse.0} parent=46 // loop_footer_branch
          %180 = sbr.rel target = $region49
        $region54: #{reverse.0} parent=46 // loop_exit
          _
      $region47: #{reverse.0} parent=38 // pred_fallthru
        _
    $region39: #{reverse.0} parent=1 // pred_fallthru
      _
    %232 = vnop

// kernel: koopman_operator_2d.1
$region0: #{koopman_operator_2d.1}
  #allocation0 [shape = 'u32[]', space=smem, size = 0x4, offset = 0x4, fixed_abs, tag = 'smem constant byte address 0x4 - core index']
  #allocation1 [shape = 'u32[144,128]{1,0:T(1,128)}', space=vmem, size = 0x12000, scoped, tag = 'internal scratch']
  %s0 = inlined_call_operand.vmem [shape: f32[2,4,4,128], index: 0, kind: input, shape index: {}]
  %s1 = inlined_call_operand.vmem [shape: f32[2,4,4,128], index: 1, kind: input, shape index: {}]
  %s2 = inlined_call_operand.vmem [shape: f32[2,4,4,128], index: 2, kind: output, shape index: {}]
  %s3 = sld [smem:[#allocation0]]
  $region18: #{koopman_operator_2d.1} parent=0
    _
  %s5 = ssub.s32 1, %s3
  %s6 = scalar_select 0, %s5, %s3
  // Predicated region
  $region2: #{koopman_operator_2d.1} parent=0 // pred_check
    _
  $region3: #{koopman_operator_2d.1} parent=0 // pred_check_branch
    %8 = sbr.rel (0) target = $region5
  $region4: #{koopman_operator_2d.1} parent=0 // pred_region
    _
  $region5: #{koopman_operator_2d.1} parent=0 // pred_fallthru
    _
  // Predicated region
  $region6: #{koopman_operator_2d.1} parent=0 // pred_check
    _
  $region7: #{koopman_operator_2d.1} parent=0 // pred_check_branch
    %10 = sbr.rel (0) target = $region9
  $region8: #{koopman_operator_2d.1} parent=0 // pred_region
    _
  $region9: #{koopman_operator_2d.1} parent=0 // pred_fallthru
    _
  %v11 = vld [vmem:[%s0] sm:$0x1]
  %v12 = vld [vmem:[%s0 + $0x4] sm:$0x1]
  %v13 = vld [vmem:[%s0 + $0x8] sm:$0x1]
  %v14 = vld [vmem:[%s0 + $0xc] sm:$0x1]
  %s15 = scalar_lea.vmem %s0, 16
  %v16 = vld [vmem:[%s15] sm:$0x1]
  %v17 = vld [vmem:[%s15 + $0x4] sm:$0x1]
  %v18 = vld [vmem:[%s15 + $0x8] sm:$0x1]
  %v19 = vld [vmem:[%s15 + $0xc] sm:$0x1]
  %v20 = vld [vmem:[%s1] sm:$0xf]
  %s21 = scalar_lea.vmem %s1, 16
  %v22 = vld [vmem:[%s21] sm:$0xf]
  %v23 = vlaneseq
  %v24 = vshrl.u32 %v23, 7
  %v25 = vsub.s32 0, %v24
  %v26 = vrot.slane %v11, %v25
  %v27 = vlaneseq
  %v28 = vshrl.u32 %v27, 7
  %v29 = vsub.s32 0, %v28
  %v30 = vrot.slane %v12, %v29
  %v31 = vlaneseq
  %v32 = vshrl.u32 %v31, 7
  %v33 = vsub.s32 0, %v32
  %v34 = vrot.slane %v13, %v33
  %v35 = vlaneseq
  %v36 = vshrl.u32 %v35, 7
  %v37 = vsub.s32 0, %v36
  %v38 = vrot.slane %v14, %v37
  %v39 = vmul.f32 %v26, %v20
  %v40 = vmul.f32 %v30, %v20
  %v41 = vmul.f32 %v34, %v20
  %v42 = vmul.f32 %v38, %v20
  %v43 = vadd.f32 %v39, 0.0
  %v44 = vadd.f32 %v40, 0.0
  %v45 = vadd.f32 %v41, 0.0
  %v46 = vadd.f32 %v42, 0.0
  %v47 = vlaneseq
  %v48 = vshrl.u32 %v47, 7
  %v49 = vsub.s32 0, %v48
  %v50 = vrot.slane %v16, %v49
  %v51 = vlaneseq
  %v52 = vshrl.u32 %v51, 7
  %v53 = vsub.s32 0, %v52
  %v54 = vrot.slane %v17, %v53
  %v55 = vlaneseq
  %v56 = vshrl.u32 %v55, 7
  %v57 = vsub.s32 0, %v56
  %v58 = vrot.slane %v18, %v57
  %v59 = vlaneseq
  %v60 = vshrl.u32 %v59, 7
  %v61 = vsub.s32 0, %v60
  %v62 = vrot.slane %v19, %v61
  %v63 = vmul.f32 %v50, %v22
  %v64 = vmul.f32 %v54, %v22
  %v65 = vmul.f32 %v58, %v22
  %v66 = vmul.f32 %v62, %v22
  %v67 = vsub.f32 %v43, %v63
  %v68 = vsub.f32 %v44, %v64
  %v69 = vsub.f32 %v45, %v65
  %v70 = vsub.f32 %v46, %v66
  %v71 = vmul.f32 %v26, %v22
  %v72 = vmul.f32 %v30, %v22
  %v73 = vmul.f32 %v34, %v22
  %v74 = vmul.f32 %v38, %v22
  %v75 = vadd.f32 %v71, 0.0
  %v76 = vadd.f32 %v72, 0.0
  %v77 = vadd.f32 %v73, 0.0
  %v78 = vadd.f32 %v74, 0.0
  %v79 = vmul.f32 %v50, %v20
  %v80 = vmul.f32 %v54, %v20
  %v81 = vmul.f32 %v58, %v20
  %v82 = vmul.f32 %v62, %v20
  %v83 = vadd.f32 %v75, %v79
  %v84 = vadd.f32 %v76, %v80
  %v85 = vadd.f32 %v77, %v81
  %v86 = vadd.f32 %v78, %v82
  %v87 = vld [vmem:[%s0 + $0x1] sm:$0x1]
  %v88 = vld [vmem:[%s0 + $0x5] sm:$0x1]
  %v89 = vld [vmem:[%s0 + $0x9] sm:$0x1]
  %v90 = vld [vmem:[%s0 + $0xd] sm:$0x1]
  %v91 = vld [vmem:[%s15 + $0x1] sm:$0x1]
  %v92 = vld [vmem:[%s15 + $0x5] sm:$0x1]
  %v93 = vld [vmem:[%s15 + $0x9] sm:$0x1]
  %v94 = vld [vmem:[%s15 + $0xd] sm:$0x1]
  %s95 = scalar_lea.vmem %s1, 4
  %v96 = vld [vmem:[%s95] sm:$0xf]
  %s97 = scalar_lea.vmem %s1, 20
  %v98 = vld [vmem:[%s97] sm:$0xf]
  %v99 = vlaneseq
  %v100 = vshrl.u32 %v99, 7
  %v101 = vsub.s32 0, %v100
  %v102 = vrot.slane %v87, %v101
  %v103 = vlaneseq
  %v104 = vshrl.u32 %v103, 7
  %v105 = vsub.s32 0, %v104
  %v106 = vrot.slane %v88, %v105
  %v107 = vlaneseq
  %v108 = vshrl.u32 %v107, 7
  %v109 = vsub.s32 0, %v108
  %v110 = vrot.slane %v89, %v109
  %v111 = vlaneseq
  %v112 = vshrl.u32 %v111, 7
  %v113 = vsub.s32 0, %v112
  %v114 = vrot.slane %v90, %v113
  %v115 = vmul.f32 %v102, %v96
  %v116 = vmul.f32 %v106, %v96
  %v117 = vmul.f32 %v110, %v96
  %v118 = vmul.f32 %v114, %v96
  %v119 = vadd.f32 %v67, %v115
  %v120 = vadd.f32 %v68, %v116
  %v121 = vadd.f32 %v69, %v117
  %v122 = vadd.f32 %v70, %v118
  %v123 = vlaneseq
  %v124 = vshrl.u32 %v123, 7
  %v125 = vsub.s32 0, %v124
  %v126 = vrot.slane %v91, %v125
  %v127 = vlaneseq
  %v128 = vshrl.u32 %v127, 7
  %v129 = vsub.s32 0, %v128
  %v130 = vrot.slane %v92, %v129
  %v131 = vlaneseq
  %v132 = vshrl.u32 %v131, 7
  %v133 = vsub.s32 0, %v132
  %v134 = vrot.slane %v93, %v133
  %v135 = vlaneseq
  %v136 = vshrl.u32 %v135, 7
  %v137 = vsub.s32 0, %v136
  %v138 = vrot.slane %v94, %v137
  %v139 = vmul.f32 %v126, %v98
  %v140 = vmul.f32 %v130, %v98
  %v141 = vmul.f32 %v134, %v98
  %v142 = vmul.f32 %v138, %v98
  %v143 = vsub.f32 %v119, %v139
  %v144 = vsub.f32 %v120, %v140
  %v145 = vsub.f32 %v121, %v141
  %v146 = vsub.f32 %v122, %v142
  %v147 = vmul.f32 %v102, %v98
  %v148 = vmul.f32 %v106, %v98
  %v149 = vmul.f32 %v110, %v98
  %v150 = vmul.f32 %v114, %v98
  %v151 = vadd.f32 %v83, %v147
  %v152 = vadd.f32 %v84, %v148
  %v153 = vadd.f32 %v85, %v149
  %v154 = vadd.f32 %v86, %v150
  %v155 = vmul.f32 %v126, %v96
  %v156 = vmul.f32 %v130, %v96
  %v157 = vmul.f32 %v134, %v96
  %v158 = vmul.f32 %v138, %v96
  %v159 = vadd.f32 %v151, %v155
  %v160 = vadd.f32 %v152, %v156
  %v161 = vadd.f32 %v153, %v157
  %v162 = vadd.f32 %v154, %v158
  %v163 = vld [vmem:[%s0 + $0x2] sm:$0x1]
  %v164 = vld [vmem:[%s0 + $0x6] sm:$0x1]
  %v165 = vld [vmem:[%s0 + $0xa] sm:$0x1]
  %v166 = vld [vmem:[%s0 + $0xe] sm:$0x1]
  %v167 = vld [vmem:[%s15 + $0x2] sm:$0x1]
  %v168 = vld [vmem:[%s15 + $0x6] sm:$0x1]
  %v169 = vld [vmem:[%s15 + $0xa] sm:$0x1]
  %v170 = vld [vmem:[%s15 + $0xe] sm:$0x1]
  %s171 = scalar_lea.vmem %s1, 8
  %v172 = vld [vmem:[%s171] sm:$0xf]
  %s173 = scalar_lea.vmem %s1, 24
  %v174 = vld [vmem:[%s173] sm:$0xf]
  %v175 = vlaneseq
  %v176 = vshrl.u32 %v175, 7
  %v177 = vsub.s32 0, %v176
  %v178 = vrot.slane %v163, %v177
  %v179 = vlaneseq
  %v180 = vshrl.u32 %v179, 7
  %v181 = vsub.s32 0, %v180
  %v182 = vrot.slane %v164, %v181
  %v183 = vlaneseq
  %v184 = vshrl.u32 %v183, 7
  %v185 = vsub.s32 0, %v184
  %v186 = vrot.slane %v165, %v185
  %v187 = vlaneseq
  %v188 = vshrl.u32 %v187, 7
  %v189 = vsub.s32 0, %v188
  %v190 = vrot.slane %v166, %v189
  %v191 = vmul.f32 %v178, %v172
  %v192 = vmul.f32 %v182, %v172
  %v193 = vmul.f32 %v186, %v172
  %v194 = vmul.f32 %v190, %v172
  %v195 = vadd.f32 %v143, %v191
  %v196 = vadd.f32 %v144, %v192
  %v197 = vadd.f32 %v145, %v193
  %v198 = vadd.f32 %v146, %v194
  %v199 = vlaneseq
  %v200 = vshrl.u32 %v199, 7
  %v201 = vsub.s32 0, %v200
  %v202 = vrot.slane %v167, %v201
  %v203 = vlaneseq
  %v204 = vshrl.u32 %v203, 7
  %v205 = vsub.s32 0, %v204
  %v206 = vrot.slane %v168, %v205
  %v207 = vlaneseq
  %v208 = vshrl.u32 %v207, 7
  %v209 = vsub.s32 0, %v208
  %v210 = vrot.slane %v169, %v209
  %v211 = vlaneseq
  %v212 = vshrl.u32 %v211, 7
  %v213 = vsub.s32 0, %v212
  %v214 = vrot.slane %v170, %v213
  %v215 = vmul.f32 %v202, %v174
  %v216 = vmul.f32 %v206, %v174
  %v217 = vmul.f32 %v210, %v174
  %v218 = vmul.f32 %v214, %v174
  %v219 = vsub.f32 %v195, %v215
  %v220 = vsub.f32 %v196, %v216
  %v221 = vsub.f32 %v197, %v217
  %v222 = vsub.f32 %v198, %v218
  %v223 = vmul.f32 %v178, %v174
  %v224 = vmul.f32 %v182, %v174
  %v225 = vmul.f32 %v186, %v174
  %v226 = vmul.f32 %v190, %v174
  %v227 = vadd.f32 %v159, %v223
  %v228 = vadd.f32 %v160, %v224
  %v229 = vadd.f32 %v161, %v225
  %v230 = vadd.f32 %v162, %v226
  %v231 = vmul.f32 %v202, %v172
  %v232 = vmul.f32 %v206, %v172
  %v233 = vmul.f32 %v210, %v172
  %v234 = vmul.f32 %v214, %v172
  %v235 = vadd.f32 %v227, %v231
  %v236 = vadd.f32 %v228, %v232
  %v237 = vadd.f32 %v229, %v233
  %v238 = vadd.f32 %v230, %v234
  %v239 = vld [vmem:[%s0 + $0x3] sm:$0x1]
  %v240 = vld [vmem:[%s0 + $0x7] sm:$0x1]
  %v241 = vld [vmem:[%s0 + $0xb] sm:$0x1]
  %v242 = vld [vmem:[%s0 + $0xf] sm:$0x1]
  %v243 = vld [vmem:[%s15 + $0x3] sm:$0x1]
  %v244 = vld [vmem:[%s15 + $0x7] sm:$0x1]
  %v245 = vld [vmem:[%s15 + $0xb] sm:$0x1]
  %v246 = vld [vmem:[%s15 + $0xf] sm:$0x1]
  %s247 = scalar_lea.vmem %s1, 12
  %v248 = vld [vmem:[%s247] sm:$0xf]
  %s249 = scalar_lea.vmem %s1, 28
  %v250 = vld [vmem:[%s249] sm:$0xf]
  %v251 = vlaneseq
  %v252 = vshrl.u32 %v251, 7
  %v253 = vsub.s32 0, %v252
  %v254 = vrot.slane %v239, %v253
  %v255 = vlaneseq
  %v256 = vshrl.u32 %v255, 7
  %v257 = vsub.s32 0, %v256
  %v258 = vrot.slane %v240, %v257
  %v259 = vlaneseq
  %v260 = vshrl.u32 %v259, 7
  %v261 = vsub.s32 0, %v260
  %v262 = vrot.slane %v241, %v261
  %v263 = vlaneseq
  %v264 = vshrl.u32 %v263, 7
  %v265 = vsub.s32 0, %v264
  %v266 = vrot.slane %v242, %v265
  %v267 = vmul.f32 %v254, %v248
  %v268 = vmul.f32 %v258, %v248
  %v269 = vmul.f32 %v262, %v248
  %v270 = vmul.f32 %v266, %v248
  %v271 = vadd.f32 %v219, %v267
  %v272 = vadd.f32 %v220, %v268
  %v273 = vadd.f32 %v221, %v269
  %v274 = vadd.f32 %v222, %v270
  %v275 = vlaneseq
  %v276 = vshrl.u32 %v275, 7
  %v277 = vsub.s32 0, %v276
  %v278 = vrot.slane %v243, %v277
  %v279 = vlaneseq
  %v280 = vshrl.u32 %v279, 7
  %v281 = vsub.s32 0, %v280
  %v282 = vrot.slane %v244, %v281
  %v283 = vlaneseq
  %v284 = vshrl.u32 %v283, 7
  %v285 = vsub.s32 0, %v284
  %v286 = vrot.slane %v245, %v285
  %v287 = vlaneseq
  %v288 = vshrl.u32 %v287, 7
  %v289 = vsub.s32 0, %v288
  %v290 = vrot.slane %v246, %v289
  %v291 = vmul.f32 %v278, %v250
  %v292 = vmul.f32 %v282, %v250
  %v293 = vmul.f32 %v286, %v250
  %v294 = vmul.f32 %v290, %v250
  %v295 = vsub.f32 %v271, %v291
  %v296 = vsub.f32 %v272, %v292
  %v297 = vsub.f32 %v273, %v293
  %v298 = vsub.f32 %v274, %v294
  %v299 = vmul.f32 %v254, %v250
  %v300 = vmul.f32 %v258, %v250
  %v301 = vmul.f32 %v262, %v250
  %v302 = vmul.f32 %v266, %v250
  %v303 = vadd.f32 %v235, %v299
  %v304 = vadd.f32 %v236, %v300
  %v305 = vadd.f32 %v237, %v301
  %v306 = vadd.f32 %v238, %v302
  %v307 = vmul.f32 %v278, %v248
  %v308 = vmul.f32 %v282, %v248
  %v309 = vmul.f32 %v286, %v248
  %v310 = vmul.f32 %v290, %v248
  %v311 = vadd.f32 %v303, %v307
  %v312 = vadd.f32 %v304, %v308
  %v313 = vadd.f32 %v305, %v309
  %v314 = vadd.f32 %v306, %v310
  %315 = vst [vmem:[%s2] sm:$0xf] %v295
  %316 = vst [vmem:[%s2 + $0x4] sm:$0xf] %v296
  %317 = vst [vmem:[%s2 + $0x8] sm:$0xf] %v297
  %318 = vst [vmem:[%s2 + $0xc] sm:$0xf] %v298
  %s319 = scalar_lea.vmem %s2, 16
  %320 = vst [vmem:[%s319] sm:$0xf] %v311
  %321 = vst [vmem:[%s319 + $0x4] sm:$0xf] %v312
  %322 = vst [vmem:[%s319 + $0x8] sm:$0xf] %v313
  %323 = vst [vmem:[%s319 + $0xc] sm:$0xf] %v314
  // Predicated region
  $region10: #{koopman_operator_2d.1} parent=0 // pred_check
    _
  $region11: #{koopman_operator_2d.1} parent=0 // pred_check_branch
    %325 = sbr.rel (0) target = $region13
  $region12: #{koopman_operator_2d.1} parent=0 // pred_region
    _
  $region13: #{koopman_operator_2d.1} parent=0 // pred_fallthru
    _
  // Predicated region
  $region14: #{koopman_operator_2d.1} parent=0 // pred_check
    _
  $region15: #{koopman_operator_2d.1} parent=0 // pred_check_branch
    %327 = sbr.rel (0) target = $region17
  $region16: #{koopman_operator_2d.1} parent=0 // pred_region
    _
  $region17: #{koopman_operator_2d.1} parent=0 // pred_fallthru
    _

</llo_original>
